<compile_context>
chip_gen: v6e
topology: v6e:2x2x1
jax: 0.10.0
libtpu: 0.0.40
codegen_flags: <defaults>
</compile_context>

<pallas_src>
import functools

import numpy as np
import jax
import jax.numpy as jnp
from jax.experimental import pallas as pl
from jax.experimental.pallas import tpu as pltpu


# ----------------------------------------------------------------------------- kernel


def _tv2d_edge_kernel(x_ref, l_ref, hm_ref, wm_ref, out_ref, *, w_shift, h_shift):
    # x_ref / l_ref : (1, 1, tbc, chunk_hw) lane-dense block (tbc B*C slices, R rows).
    # hm_ref/wm_ref : (1, 1, chunk_hw) masks, pre-scaled by 1/count_h and 1/count_w.
    x = x_ref[0, 0].astype(jnp.float32)        # (tbc, chunk_hw)
    lm = l_ref[0, 0].astype(jnp.float32)       # (tbc, chunk_hw)
    h_mask = hm_ref[0]                         # (1, chunk_hw) f32
    w_mask = wm_ref[0]                         # (1, chunk_hw) f32

    # horizontal neighbour: lane +1 (rolled[i] = x[(i + 1) mod chunk_hw])
    x_w = pltpu.roll(x, w_shift, 1)
    l_w = pltpu.roll(lm, w_shift, 1)
    # vertical neighbour: lane +W within the chunk (rolled[i] = x[(i + W) mod chunk_hw])
    x_h = pltpu.roll(x, h_shift, 1)
    l_h = pltpu.roll(lm, h_shift, 1)

    d_xw = x_w - x
    d_lw = l_w - lm
    d_xh = x_h - x
    d_lh = l_h - lm

    term = (d_xw * d_xw * (1.0 - d_lw * d_lw) * w_mask
            + d_xh * d_xh * (1.0 - d_lh * d_lh) * h_mask)

    # one combined, count-scaled partial per grid step
    out_ref[...] = jnp.full(out_ref.shape, jnp.sum(term), dtype=out_ref.dtype)


# ----------------------------------------------------------------------------- planning


def _lane_pad(n):
    return -(-n // 128) * 128


def _plan_blocks(BC, H, W, dtype_bytes, per_buf_budget, num_cores):
    sub = 8 if dtype_bytes >= 4 else (16 if dtype_bytes == 2 else 32)

    # Rows per chunk: full image if one sublane-group of slices fits the budget,
    # otherwise chunk the row axis (lane axis stays row-major / lane-dense).
    if sub * _lane_pad(H * W) * dtype_bytes <= per_buf_budget:
        R = H
    else:
        R = max(1, per_buf_budget // (sub * dtype_bytes * W))
        while R > 1 and sub * _lane_pad(R * W) * dtype_bytes > per_buf_budget:
            R -= 1
        R = min(R, H)
    num_chunks = -(-H // R)

    # B*C slices fused per block (multiple of the sublane packing).
    row_bytes = max(1, _lane_pad(R * W) * dtype_bytes)
    tbc = max(sub, (per_buf_budget // row_bytes) // sub * sub)
    bc_sub_blocks = -(-BC // sub)
    tbc = min(tbc, bc_sub_blocks * sub)
    # v7x megacore: keep >= 2 grid points along the BC axis when it can split.
    if num_cores >= 2 and num_chunks == 1 and bc_sub_blocks >= 2:
        tbc = min(tbc, sub * ((bc_sub_blocks + 1) // 2))
    tbc = max(sub, (tbc // sub) * sub)
    num_bc_blocks = -(-BC // tbc)
    return tbc, num_bc_blocks, R, num_chunks


def _vmem_estimate(tbc, chunk_hw, dtype_bytes):
    lp = _lane_pad(chunk_hw)
    in_block = tbc * lp * dtype_bytes
    mask_block = 8 * lp * 4              # (1, chunk_hw) pads to 8 sublanes
    f32_block = tbc * lp * 4
    # 2 inputs x 2 buffers + 2 masks x 2 buffers + ~8 block-sized f32 temporaries
    return 4 * in_block + 4 * mask_block + 8 * f32_block + (4 << 20)


# ----------------------------------------------------------------------------- wrapper


def tv_loss_2d_edge(x, L, tv_loss_weight: float = 1.0, *, _per_buffer_budget=None):
    """Exact JAX/Pallas equivalent of TVLoss_2d_edge.forward for NCHW inputs."""
    assert x.shape == L.shape, (x.shape, L.shape)
    B, C, H, W = x.shape
    BC = B * C
    count_h = C * (H - 1) * W
    count_w = C * H * (W - 1)

    # generation-aware budgets
    is_v7x = False
    try:
        is_v7x = "v7" in jax.devices()[0].device_kind.lower()
    except Exception:
        pass
    num_cores = 2 if is_v7x else 1
    vmem_cap = (48 << 20) if is_v7x else (96 << 20)
    per_buf = int(_per_buffer_budget) if _per_buffer_budget else ((2 << 20) if is_v7x else (4 << 20))

    dtype_bytes = x.dtype.itemsize
    while True:
        tbc, num_bc_blocks, R, num_chunks = _plan_blocks(
            BC, H, W, dtype_bytes, per_buf, num_cores)
        est = _vmem_estimate(tbc, R * W, dtype_bytes)
        if est <= vmem_cap or per_buf <= (256 << 10):
            break
        per_buf //= 2
    # NOTE: extremely wide single rows (W alone exceeding the budget) are not
    # W-chunked; they fall through with the smallest possible block.
    vmem_limit = int(min(vmem_cap, max(est, 32 << 20)))

    chunk_hw = R * W
    BC_pad = num_bc_blocks * tbc
    H_pad = num_chunks * R

    # lane-dense, block-major layout: (num_bc_blocks, num_chunks, tbc, R*W)
    def to_blocks(a):
        a = a.reshape(BC, H, W)
        if BC_pad != BC or H_pad != H:
            a = jnp.pad(a, ((0, BC_pad - BC), (0, H_pad - H), (0, 0)))
        a = a.reshape(num_bc_blocks, tbc, num_chunks, R, W)
        a = jnp.transpose(a, (0, 2, 1, 3, 4))
        return a.reshape(num_bc_blocks, num_chunks, tbc, chunk_hw)

    xb = to_blocks(x)
    lb = to_blocks(L)

    # host-precomputed, count-scaled validity masks (per row-chunk)
    j_idx = jnp.arange(num_chunks, dtype=jnp.int32)[:, None, None]
    r_idx = jnp.arange(R, dtype=jnp.int32)[None, :, None]
    c_idx = jnp.arange(W, dtype=jnp.int32)[None, None, :]
    g_row = j_idx * R + r_idx                                   # global row index
    h_valid = jnp.broadcast_to((r_idx < R - 1) & (g_row + 1 < H), (num_chunks, R, W))
    w_valid = (c_idx < W - 1) & (g_row < H)
    h_mask = h_valid.astype(jnp.float32).reshape(num_chunks, 1, chunk_hw) / count_h
    w_mask = w_valid.astype(jnp.float32).reshape(num_chunks, 1, chunk_hw) / count_w

    kernel = functools.partial(
        _tv2d_edge_kernel, w_shift=chunk_hw - 1, h_shift=chunk_hw - W)

    partials = pl.pallas_call(
        kernel,
        grid=(num_chunks, num_bc_blocks),
        in_specs=[
            pl.BlockSpec((1, 1, tbc, chunk_hw), lambda j, i: (i, j, 0, 0)),
            pl.BlockSpec((1, 1, tbc, chunk_hw), lambda j, i: (i, j, 0, 0)),
            pl.BlockSpec((1, 1, chunk_hw), lambda j, i: (j, 0, 0)),
            pl.BlockSpec((1, 1, chunk_hw), lambda j, i: (j, 0, 0)),
        ],
        out_specs=pl.BlockSpec((1, 1, 1, 1), lambda j, i: (j, i, 0, 0)),
        out_shape=jax.ShapeDtypeStruct((num_chunks, num_bc_blocks, 1, 1), jnp.float32),
        compiler_params=pltpu.CompilerParams(
            dimension_semantics=("parallel", "parallel"),
            vmem_limit_bytes=vmem_limit,
        ),
    )(xb, lb, h_mask, w_mask)

    total = jnp.sum(partials)

    # Cross-chunk vertical seam terms (only when the row axis was chunked): a tiny
    # number of row pairs, reduced in plain JAX.
    if num_chunks > 1:
        rows = np.arange(1, num_chunks, dtype=np.int64) * R - 1
        rows = rows[(rows + 1) < H]
        if rows.size:
            x3 = x.reshape(BC, H, W).astype(jnp.float32)
            l3 = L.reshape(BC, H, W).astype(jnp.float32)
            dx = x3[:, rows + 1, :] - x3[:, rows, :]
            dl = l3[:, rows + 1, :] - l3[:, rows, :]
            total = total + jnp.sum(dx * dx * (1.0 - dl * dl)) / count_h

    return (tv_loss_weight * 2.0 / B) * total


# ----------------------------------------------------------------------------- reference


def _tv_loss_2d_edge_ref(x, L, tv_loss_weight: float = 1.0):
    # Pure-JAX reference (mirrors the PyTorch module exactly).
    B, C, H, W = x.shape
    xf = x.astype(jnp.float32)
    lf = L.astype(jnp.float32)
    count_h = C * (H - 1) * W
    count_w = C * H * (W - 1)
    h_L = (lf[:, :, 1:, :] - lf[:, :, :-1, :]) ** 2
    w_L = (lf[:, :, :, 1:] - lf[:, :, :, :-1]) ** 2
    h_t = (xf[:, :, 1:, :] - xf[:, :, :-1, :]) ** 2
    w_t = (xf[:, :, :, 1:] - xf[:, :, :, :-1]) ** 2
    h_tv = jnp.sum(h_t * (1.0 - h_L))
    w_tv = jnp.sum(w_t * (1.0 - w_L))
    return tv_loss_weight * 2.0 * (h_tv / count_h + w_tv / count_w) / B


if __name__ == "__main__":
    key = jax.random.PRNGKey(0)
    k1, k2, k3, k4 = jax.random.split(key, 4)

    # Case 1: standard NCHW input, single-chunk fast path.
    x = jax.random.normal(k1, (2, 4, 16, 16), dtype=jnp.float32)    # NCHW image
    L = jax.random.uniform(k2, (2, 4, 16, 16), dtype=jnp.float32)   # NCHW edge map
    out = jax.block_until_ready(tv_loss_2d_edge(x, L, tv_loss_weight=1.0))
    ref = jax.block_until_ready(_tv_loss_2d_edge_ref(x, L, tv_loss_weight=1.0))
    assert jnp.allclose(out, ref, rtol=1e-5, atol=1e-5), (out, ref)

    # Case 2: force the row-chunked (large-image) path with a tiny buffer budget;
    # exercises B*C padding, H padding and the cross-chunk seam terms.
    x2 = jax.random.normal(k3, (1, 3, 10, 32), dtype=jnp.float32)
    L2 = jax.random.uniform(k4, (1, 3, 10, 32), dtype=jnp.float32)
    out2 = jax.block_until_ready(tv_loss_2d_edge(x2, L2, 1.0, _per_buffer_budget=4096))
    ref2 = jax.block_until_ready(_tv_loss_2d_edge_ref(x2, L2, 1.0))
    assert jnp.allclose(out2, ref2, rtol=1e-5, atol=1e-5), (out2, ref2)

    print("KERNEL_OK")
</pallas_src>

<mosaic_0001>
module attributes {stable_mosaic.version = 11 : i64} {
  func.func @_tv2d_edge_kernel(%arg0: i32, %arg1: i32, %arg2: memref<1x1x8x256xf32, #tpu.memory_space<vmem>>, %arg3: memref<1x1x8x256xf32, #tpu.memory_space<vmem>>, %arg4: memref<1x1x256xf32, #tpu.memory_space<vmem>>, %arg5: memref<1x1x256xf32, #tpu.memory_space<vmem>>, %arg6: memref<1x1x1x1xf32, #tpu.memory_space<vmem>>) attributes {dimension_semantics = [#tpu.dimension_semantics<parallel>, #tpu.dimension_semantics<parallel>], iteration_bounds = array<i64: 1, 1>, scalar_prefetch = 0 : i64, scratch_operands = 0 : i64, tpu.core_type = #tpu.core_type<tc>, window_params = [{transform_indices = @transform_0, window_bounds = array<i64: 1, 1, 8, 256>}, {transform_indices = @transform_1, window_bounds = array<i64: 1, 1, 8, 256>}, {transform_indices = @transform_2, window_bounds = array<i64: 1, 1, 256>}, {transform_indices = @transform_3, window_bounds = array<i64: 1, 1, 256>}, {transform_indices = @transform_4, window_bounds = array<i64: 1, 1, 1, 1>}]} {
    %c0 = arith.constant 0 : index
    %c0_0 = arith.constant 0 : index
    %c0_1 = arith.constant 0 : index
    %c0_2 = arith.constant 0 : index
    %0 = vector.load %arg2[%c0, %c0_0, %c0_1, %c0_2] : memref<1x1x8x256xf32, #tpu.memory_space<vmem>>, vector<1x1x8x256xf32>
    %1 = vector.shape_cast %0 : vector<1x1x8x256xf32> to vector<8x256xf32>
    %c0_3 = arith.constant 0 : index
    %c0_4 = arith.constant 0 : index
    %c0_5 = arith.constant 0 : index
    %c0_6 = arith.constant 0 : index
    %2 = vector.load %arg3[%c0_3, %c0_4, %c0_5, %c0_6] : memref<1x1x8x256xf32, #tpu.memory_space<vmem>>, vector<1x1x8x256xf32>
    %3 = vector.shape_cast %2 : vector<1x1x8x256xf32> to vector<8x256xf32>
    %c0_7 = arith.constant 0 : index
    %c0_8 = arith.constant 0 : index
    %c0_9 = arith.constant 0 : index
    %4 = vector.load %arg4[%c0_7, %c0_8, %c0_9] : memref<1x1x256xf32, #tpu.memory_space<vmem>>, vector<1x1x256xf32>
    %5 = vector.shape_cast %4 : vector<1x1x256xf32> to vector<1x256xf32>
    %c0_10 = arith.constant 0 : index
    %c0_11 = arith.constant 0 : index
    %c0_12 = arith.constant 0 : index
    %6 = vector.load %arg5[%c0_10, %c0_11, %c0_12] : memref<1x1x256xf32, #tpu.memory_space<vmem>>, vector<1x1x256xf32>
    %7 = vector.shape_cast %6 : vector<1x1x256xf32> to vector<1x256xf32>
    %c255_i32 = arith.constant 255 : i32
    %8 = tpu.dynamic_rotate %1 by %c255_i32 dim 1 : vector<8x256xf32>, i32 -> vector<8x256xf32>
    %c255_i32_13 = arith.constant 255 : i32
    %9 = tpu.dynamic_rotate %3 by %c255_i32_13 dim 1 : vector<8x256xf32>, i32 -> vector<8x256xf32>
    %c240_i32 = arith.constant 240 : i32
    %10 = tpu.dynamic_rotate %1 by %c240_i32 dim 1 : vector<8x256xf32>, i32 -> vector<8x256xf32>
    %c240_i32_14 = arith.constant 240 : i32
    %11 = tpu.dynamic_rotate %3 by %c240_i32_14 dim 1 : vector<8x256xf32>, i32 -> vector<8x256xf32>
    %12 = arith.subf %8, %1 : vector<8x256xf32>
    %13 = arith.subf %9, %3 : vector<8x256xf32>
    %14 = arith.subf %10, %1 : vector<8x256xf32>
    %15 = arith.subf %11, %3 : vector<8x256xf32>
    %16 = arith.mulf %12, %12 : vector<8x256xf32>
    %17 = arith.mulf %13, %13 : vector<8x256xf32>
    %cst = arith.constant 1.000000e+00 : f32
    %18 = vector.broadcast %cst : f32 to vector<8x256xf32>
    %19 = arith.subf %18, %17 : vector<8x256xf32>
    %20 = arith.mulf %16, %19 : vector<8x256xf32>
    %21 = vector.broadcast %7 : vector<1x256xf32> to vector<8x256xf32>
    %22 = arith.mulf %20, %21 : vector<8x256xf32>
    %23 = arith.mulf %14, %14 : vector<8x256xf32>
    %24 = arith.mulf %15, %15 : vector<8x256xf32>
    %cst_15 = arith.constant 1.000000e+00 : f32
    %25 = vector.broadcast %cst_15 : f32 to vector<8x256xf32>
    %26 = arith.subf %25, %24 : vector<8x256xf32>
    %27 = arith.mulf %23, %26 : vector<8x256xf32>
    %28 = vector.broadcast %5 : vector<1x256xf32> to vector<8x256xf32>
    %29 = arith.mulf %27, %28 : vector<8x256xf32>
    %30 = arith.addf %22, %29 : vector<8x256xf32>
    %31 = vector.shape_cast %30 : vector<8x256xf32> to vector<1x8x256xf32>
    %cst_16 = arith.constant dense<0.000000e+00> : vector<1xf32>
    %32 = vector.multi_reduction <add>, %31, %cst_16 [1, 2] : vector<1x8x256xf32> to vector<1xf32>
    %33 = vector.shape_cast %32 : vector<1xf32> to vector<1x1x1xf32>
    %34 = vector.extract %33[0, 0, 0] : f32 from vector<1x1x1xf32>
    %35 = vector.broadcast %34 : f32 to vector<1x1x1x1xf32>
    %c0_17 = arith.constant 0 : index
    %c0_18 = arith.constant 0 : index
    %c0_19 = arith.constant 0 : index
    %c0_20 = arith.constant 0 : index
    %36 = vector.load %arg6[%c0_17, %c0_18, %c0_19, %c0_20] : memref<1x1x1x1xf32, #tpu.memory_space<vmem>>, vector<1x1x1x1xf32>
    tpu.vector_store %arg6[%c0_17, %c0_18, %c0_19, %c0_20], %35 {strides = array<i32>} : memref<1x1x1x1xf32, #tpu.memory_space<vmem>>, vector<1x1x1x1xf32>,
    return
  }
  func.func @transform_0(%arg0: i32, %arg1: i32) -> (i32, i32, i32, i32) {
    %c0_i32 = arith.constant 0 : i32
    %c0_i32_0 = arith.constant 0 : i32
    %c0_i32_1 = arith.constant 0 : i32
    return %arg1, %arg0, %c0_i32, %c0_i32_0 : i32, i32, i32, i32
  }
  func.func @transform_1(%arg0: i32, %arg1: i32) -> (i32, i32, i32, i32) {
    %c0_i32 = arith.constant 0 : i32
    %c0_i32_0 = arith.constant 0 : i32
    %c0_i32_1 = arith.constant 0 : i32
    return %arg1, %arg0, %c0_i32, %c0_i32_0 : i32, i32, i32, i32
  }
  func.func @transform_2(%arg0: i32, %arg1: i32) -> (i32, i32, i32) {
    %c0_i32 = arith.constant 0 : i32
    %c0_i32_0 = arith.constant 0 : i32
    %c0_i32_1 = arith.constant 0 : i32
    return %arg0, %c0_i32, %c0_i32_0 : i32, i32, i32
  }
  func.func @transform_3(%arg0: i32, %arg1: i32) -> (i32, i32, i32) {
    %c0_i32 = arith.constant 0 : i32
    %c0_i32_0 = arith.constant 0 : i32
    %c0_i32_1 = arith.constant 0 : i32
    return %arg0, %c0_i32, %c0_i32_0 : i32, i32, i32
  }
  func.func @transform_4(%arg0: i32, %arg1: i32) -> (i32, i32, i32, i32) {
    %c0_i32 = arith.constant 0 : i32
    %c0_i32_0 = arith.constant 0 : i32
    %c0_i32_1 = arith.constant 0 : i32
    return %arg0, %arg1, %c0_i32, %c0_i32_0 : i32, i32, i32, i32
  }
}

</mosaic_0001>

<llo_original>
// kernel: tpu_custom_call.1
$region0: #{tpu_custom_call.1}
  #allocation0 [shape = 'u32[]', space=smem, size = 0x4, offset = 0x4, fixed_abs, tag = 'smem constant byte address 0x4 - core index']
  #allocation1 [shape = 'u32[144,128]{1,0:T(1,128)}', space=vmem, size = 0x12000, scoped, tag = 'internal scratch']
  %s0 = inlined_call_operand.hbm [shape: f32[1,1,8,256], index: 0, kind: input, shape index: {}]
  %s1 = inlined_call_operand.hbm [shape: f32[1,1,8,256], index: 1, kind: input, shape index: {}]
  %s2 = inlined_call_operand.vmem [shape: f32[1,1,256], index: 2, kind: input, shape index: {}]
  %s3 = inlined_call_operand.vmem [shape: f32[1,1,256], index: 3, kind: input, shape index: {}]
  %s4 = inlined_call_operand.hbm [shape: f32[1,1,1,1], index: 4, kind: output, shape index: {}]
  %s5 = sld [smem:[#allocation0]]
  $region34: #{tpu_custom_call.1} parent=0
    _
  %s7 = ssub.s32 1, %s5
  %s8 = scalar_select 0, %s7, %s5
  $region1: #{tpu_custom_call.1} parent=0
    #allocation2 [shape = 'u8[8192]{0}', space=vmem, size = 0x2000, scoped, tag = 'input window, operand 0, single buffered']
    #allocation3 [shape = 's32[1]{0}', space=sflag, size = 0x4, scoped, tag = 'scoped memory for tpu_custom_call.1']
    #allocation4 [shape = 's32[1]{0}', space=sflag, size = 0x4, scoped, tag = 'scoped memory for tpu_custom_call.1']
    #allocation5 [shape = 'u8[8192]{0}', space=vmem, size = 0x2000, scoped, tag = 'input window, operand 1, single buffered']
    #allocation6 [shape = 's32[1]{0}', space=sflag, size = 0x4, scoped, tag = 'scoped memory for tpu_custom_call.1']
    #allocation7 [shape = 'u8[512]{0}', space=vmem, size = 0x400, scoped, tag = 'output window, operand 0, single buffered']
    %9 = vsyncpa [#allocation3], 0
    %10 = vsyncpa [#allocation6], 0
    %11 = vsyncpa [#allocation4], 0
    // Predicated region
    $region2: #{tpu_custom_call.1} parent=1 // pred_check
      _
    $region3: #{tpu_custom_call.1} parent=1 // pred_check_branch
      %13 = sbr.rel (0) target = $region5
    $region4: #{tpu_custom_call.1} parent=1 // pred_region
      %s15 = ssub.s32 256, 256
      %16 = vsyncadd [#allocation3], %s15
      %s18 = sshll.u32 [#allocation2], 4
      %s19 = int_to_ptr.vmem [resolvable:$true] %s18
      %21 = dma.hbm_to_vmem [thread:$0]  %s0, 256, %s19, [#allocation3]
    $region5: #{tpu_custom_call.1} parent=1 // pred_fallthru
      _
    // Predicated region
    $region6: #{tpu_custom_call.1} parent=1 // pred_check
      _
    $region7: #{tpu_custom_call.1} parent=1 // pred_check_branch
      %23 = sbr.rel (0) target = $region9
    $region8: #{tpu_custom_call.1} parent=1 // pred_region
      %s25 = ssub.s32 256, 256
      %26 = vsyncadd [#allocation6], %s25
      %s28 = sshll.u32 [#allocation5], 4
      %s29 = int_to_ptr.vmem [resolvable:$true] %s28
      %31 = dma.hbm_to_vmem [thread:$0]  %s1, 256, %s29, [#allocation6]
    $region9: #{tpu_custom_call.1} parent=1 // pred_fallthru
      _
    // Predicated region
    $region10: #{tpu_custom_call.1} parent=1 // pred_check
      _
    $region11: #{tpu_custom_call.1} parent=1 // pred_check_branch
      %33 = sbr.rel (0) target = $region13
    $region12: #{tpu_custom_call.1} parent=1 // pred_region
      _
    $region13: #{tpu_custom_call.1} parent=1 // pred_fallthru
      _
    // Predicated region
    $region14: #{tpu_custom_call.1} parent=1 // pred_check
      _
    $region15: #{tpu_custom_call.1} parent=1 // pred_check_branch
      %35 = sbr.rel (0) target = $region17
    $region16: #{tpu_custom_call.1} parent=1 // pred_region
      _
    $region17: #{tpu_custom_call.1} parent=1 // pred_fallthru
      _
    // Predicated region
    $region18: #{tpu_custom_call.1} parent=1 // pred_check
      _
    $region19: #{tpu_custom_call.1} parent=1 // pred_check_branch
      %37 = sbr.rel (0) target = $region21
    $region20: #{tpu_custom_call.1} parent=1 // pred_region
      %38 = dma.done [#allocation3], 256
    $region21: #{tpu_custom_call.1} parent=1 // pred_fallthru
      _
    // Predicated region
    $region22: #{tpu_custom_call.1} parent=1 // pred_check
      _
    $region23: #{tpu_custom_call.1} parent=1 // pred_check_branch
      %40 = sbr.rel (0) target = $region25
    $region24: #{tpu_custom_call.1} parent=1 // pred_region
      %41 = dma.done [#allocation6], 256
    $region25: #{tpu_custom_call.1} parent=1 // pred_fallthru
      _
    %v42 = vld [vmem:[#allocation2] sm:$0xff]
    %v43 = vld [vmem:[#allocation2 + $0x8] sm:$0xff]
    %v44 = vld [vmem:[#allocation5] sm:$0xff]
    %v45 = vld [vmem:[#allocation5 + $0x8] sm:$0xff]
    %v46 = vld [vmem:[%s2] sm:$0x3]
    %v47 = vld [vmem:[%s3] sm:$0x3]
    %48 = vrot.lane.b32.xlu0 %v42, 127
    %v49 = vpop.permute.xlu0 %48
    %50 = vrot.lane.b32.xlu0 %v43, 127
    %v51 = vpop.permute.xlu0 %50
    %v52 = vlaneseq
    %v53 = vand.u32 %v52, 127
    %vm54 = vcmp.lt.s32.totalorder %v53, 127
    %v55 = vsel %vm54, %v49, %v51
    %v56 = vsel %vm54, %v51, %v49
    %57 = vrot.lane.b32.xlu0 %v44, 127
    %v58 = vpop.permute.xlu0 %57
    %59 = vrot.lane.b32.xlu0 %v45, 127
    %v60 = vpop.permute.xlu0 %59
    %v61 = vsel %vm54, %v58, %v60
    %v62 = vsel %vm54, %v60, %v58
    %63 = vrot.lane.b32.xlu0 %v42, 112
    %v64 = vpop.permute.xlu0 %63
    %65 = vrot.lane.b32.xlu0 %v43, 112
    %v66 = vpop.permute.xlu0 %65
    %vm67 = vcmp.lt.s32.totalorder %v53, 112
    %v68 = vsel %vm67, %v64, %v66
    %v69 = vsel %vm67, %v66, %v64
    %70 = vrot.lane.b32.xlu0 %v44, 112
    %v71 = vpop.permute.xlu0 %70
    %72 = vrot.lane.b32.xlu0 %v45, 112
    %v73 = vpop.permute.xlu0 %72
    %v74 = vsel %vm67, %v71, %v73
    %v75 = vsel %vm67, %v73, %v71
    %v76 = vsub.f32 %v55, %v42
    %v77 = vsub.f32 %v56, %v43
    %v78 = vsub.f32 %v61, %v44
    %v79 = vsub.f32 %v62, %v45
    %v80 = vsub.f32 %v68, %v42
    %v81 = vsub.f32 %v69, %v43
    %v82 = vsub.f32 %v74, %v44
    %v83 = vsub.f32 %v75, %v45
    %v84 = vmul.f32 %v76, %v76
    %v85 = vmul.f32 %v77, %v77
    %v86 = vmul.f32 %v78, %v78
    %v87 = vmul.f32 %v79, %v79
    %v88 = vsub.f32 1.0, %v86
    %v89 = vsub.f32 1.0, %v87
    %v90 = vmul.f32 %v84, %v88
    %v91 = vmul.f32 %v85, %v89
    %v93 = vlaneseq
    %v94 = vshrl.u32 %v93, 7
    %v95 = vsub.s32 0, %v94
    %v96 = vrot.slane %v47, %v95
    %v97 = vlaneseq
    %v98 = vshrl.u32 %v97, 7
    %v99 = vsub.s32 1, %v98
    %v100 = vrot.slane %v47, %v99
    %v103 = vmul.f32 %v90, %v96
    %v104 = vmul.f32 %v91, %v100
    %v105 = vmul.f32 %v80, %v80
    %v106 = vmul.f32 %v81, %v81
    %v107 = vmul.f32 %v82, %v82
    %v108 = vmul.f32 %v83, %v83
    %v109 = vsub.f32 1.0, %v107
    %v110 = vsub.f32 1.0, %v108
    %v111 = vmul.f32 %v105, %v109
    %v112 = vmul.f32 %v106, %v110
    %v114 = vlaneseq
    %v115 = vshrl.u32 %v114, 7
    %v116 = vsub.s32 0, %v115
    %v117 = vrot.slane %v46, %v116
    %v118 = vlaneseq
    %v119 = vshrl.u32 %v118, 7
    %v120 = vsub.s32 1, %v119
    %v121 = vrot.slane %v46, %v120
    %v124 = vmul.f32 %v111, %v117
    %v125 = vmul.f32 %v112, %v121
    %v126 = vadd.f32 %v103, %v124
    %v127 = vadd.f32 %v104, %v125
    %v128 = vadd.f32 %v126, %v127
    %129 = vadd.xlane.f32.xlu0 %v128
    %v130 = vpop.xlane.xlu0 %129
    %v131 = vrot.slane %v130, 4
    %v132 = vadd.f32 %v130, %v131
    %v133 = vrot.slane %v132, 2
    %v134 = vadd.f32 %v132, %v133
    %v135 = vrot.slane %v134, 1
    %v136 = vadd.f32 %v134, %v135
    %s137 = vtos %v136
    %v138 = vstv %s137
    %vm139 = vcmask 0
    %140 = vst.msk [vmem:[#allocation7] sm:$0x1] %vm139, %v138
    // Predicated region
    $region26: #{tpu_custom_call.1} parent=1 // pred_check
      _
    $region27: #{tpu_custom_call.1} parent=1 // pred_check_branch
      %142 = sbr.rel (0) target = $region29
    $region28: #{tpu_custom_call.1} parent=1 // pred_region
      %s144 = ssub.s32 16, 16
      %145 = vsyncadd [#allocation4], %s144
      %s147 = sshll.u32 [#allocation7], 4
      %s148 = int_to_ptr.vmem [resolvable:$true] %s147
      %150 = dma.vmem_to_hbm [thread:$0]  %s148, 16, %s4, [#allocation4]
    $region29: #{tpu_custom_call.1} parent=1 // pred_fallthru
      _
    // Predicated region
    $region30: #{tpu_custom_call.1} parent=1 // pred_check
      _
    $region31: #{tpu_custom_call.1} parent=1 // pred_check_branch
      %152 = sbr.rel (0) target = $region33
    $region32: #{tpu_custom_call.1} parent=1 // pred_region
      %153 = dma.done [#allocation4], 16
    $region33: #{tpu_custom_call.1} parent=1 // pred_fallthru
      _
    %154 = vsyncpa [#allocation3], 1
    %155 = vsyncpa [#allocation6], 1
    %156 = vsyncpa [#allocation4], 1

</llo_original>
